<compile_context>
chip_gen: v6e
topology: v6e:2x2x1
jax: 0.10.0
libtpu: 0.0.40
codegen_flags: <defaults>
</compile_context>

<pallas_src>
import functools

import jax
import jax.numpy as jnp
from jax import lax
from jax.experimental import pallas as pl
from jax.experimental.pallas import tpu as pltpu

ALPHA = 1.0   # FocalLoss default alpha
GAMMA = 2     # FocalLoss default gamma (int -> integer power, never an EUP pow)

_LANES = 128
_SUBLANES = 8


def _cdiv(a, b):
    return -(-a // b)


def _round_up(a, b):
    return _cdiv(a, b) * b


def _device_tuning():
    """(num_parallel_chunks, default_block_rows, vmem_limit_bytes) per TPU generation."""
    try:
        kind = jax.devices()[0].device_kind.lower()
    except Exception:
        kind = ""
    is_v7 = ("v7" in kind) or ("7x" in kind)
    single_tc = (not is_v7) and (("lite" in kind) or ("v5e" in kind) or ("v6e" in kind))
    if is_v7:
        # 64 MiB physical VMEM per TC, 2 TCs/chip: 2 MiB blocks, 2-way parallel split.
        return 2, 4096, 48 << 20
    if single_tc:
        # v5e / v6e: single TensorCore, 128 MiB VMEM: 4 MiB blocks, no chunk split.
        return 1, 8192, 64 << 20
    # v4 / v5p / other: megacore-style 2-way split, 128 MiB VMEM assumed.
    return 2, 8192, 64 << 20


def _focal_sum_kernel(x_ref, t_ref, out_ref, acc_ref, *,
                      label_smoothing, full_rows, rem, block_rows):
    """Accumulate per-(sublane, lane) partial sums of the focal loss.

    Grid = (num_chunks [parallel], steps [arbitrary]).  acc_ref is an (8, 128) f32
    VMEM scratch carried across the 'steps' axis; the per-chunk scalar sum is
    written to out_ref only at the last step (epilogue).
    """
    c = pl.program_id(0)
    s = pl.program_id(1)
    steps = pl.num_programs(1)

    @pl.when(s == 0)
    def _():
        acc_ref[...] = jnp.zeros_like(acc_ref)

    x = x_ref[...].astype(jnp.float32)   # (block_rows, 128) logits
    t = t_ref[...].astype(jnp.float32)   # (block_rows, 128) targets

    if label_smoothing:
        # targets[targets == 1] = 1.0 - label_smoothing (constant baked at trace time)
        t = jnp.where(t == 1.0, jnp.float32(1.0 - label_smoothing), t)

    # binary_cross_entropy_with_logits, reduction='none' (numerically stable form)
    bce = jnp.maximum(x, 0.0) - x * t + jnp.log1p(jnp.exp(-jnp.abs(x)))
    pt = jnp.exp(-bce)
    q = 1.0 - pt
    if GAMMA == 2:
        focal = q * q                      # integer square: no EUP pow, no log(0)
    elif float(GAMMA).is_integer():
        focal = q ** int(GAMMA)
    else:
        focal = q ** GAMMA
    f_loss = focal * bce
    if ALPHA != 1.0:                       # alpha == 1 -> skip the multiply entirely
        f_loss = jnp.float32(ALPHA) * f_loss

    # Logical block id -> first global row covered by this step.  Both phantom
    # trailing steps (num_row_blocks not a multiple of num_chunks) and the ragged
    # tail fall into the masked branch; full interior blocks take the clean path.
    start_row = (c * steps + s) * block_rows
    is_clean = start_row + block_rows <= full_rows

    @pl.when(is_clean)
    def _():
        # Hot loop: pure VPU adds into the vreg-shaped scratch, no mask, no XLU.
        acc_ref[...] += f_loss.reshape(-1, _SUBLANES, _LANES).sum(axis=0)

    @pl.when(jnp.logical_not(is_clean))
    def _():
        row = lax.broadcasted_iota(jnp.int32, (block_rows, _LANES), 0) + start_row
        if rem:
            lane = lax.broadcasted_iota(jnp.int32, (block_rows, _LANES), 1)
            valid = (row < full_rows) | ((row == full_rows) & (lane < rem))
        else:
            valid = row < full_rows
        masked = jnp.where(valid, f_loss, 0.0)
        acc_ref[...] += masked.reshape(-1, _SUBLANES, _LANES).sum(axis=0)

    @pl.when(s == steps - 1)
    def _():
        # Single XLU reduce per chunk, off the hot loop; write one scalar per chunk.
        out_ref[0, :, :] = jnp.sum(acc_ref[...], keepdims=True)


def binary_focal_loss(inputs, targets, *, label_smoothing=0.1):
    """Binary_Loss_wrapper.forward for loss='focal'.

    inputs, targets: NCHW arrays of shape (B, C, H, W); any float (or integer
    target) dtype is accepted and cast to f32 inside the kernel.
    Returns a scalar float32 loss.
    """
    B, C, H, W = inputs.shape
    total = B * C * H * W
    n_per_class = B * H * W

    num_chunks_pref, block_rows, vmem_limit = _device_tuning()

    # Free reshape of the contiguous NCHW buffers (no transpose, no extra HBM pass).
    x = inputs.reshape(-1)
    t = targets.reshape(-1)

    full_rows, rem = divmod(total, _LANES)
    if rem:
        # TODO(synk): rare corner case (total % 128 != 0); the <=127-element pad still
        # materializes a copy of the flat buffers.  Pad values are irrelevant because
        # the in-kernel mask (against the original `total`) zeroes their contribution.
        x = jnp.pad(x, (0, _LANES - rem))
        t = jnp.pad(t, (0, _LANES - rem))
    rows = _cdiv(total, _LANES)
    x = x.reshape(rows, _LANES)
    t = t.reshape(rows, _LANES)

    # Shrink the block for small problems; keep block_rows a multiple of 32 so
    # bf16 (16,128) / int8 (32,128) sublane packing stays natural.
    block_rows = min(block_rows, _round_up(rows, 32))

    num_row_blocks = _cdiv(rows, block_rows)
    num_chunks = max(1, min(num_chunks_pref, num_row_blocks))
    steps = _cdiv(num_row_blocks, num_chunks)

    if num_chunks * steps == num_row_blocks:
        def in_map(c, s):
            return (c * steps + s, 0)
    else:
        last_blk = num_row_blocks - 1

        def in_map(c, s):
            # Phantom trailing steps re-read the last real block; their contribution
            # is zeroed by the in-kernel mask.
            return (jnp.minimum(c * steps + s, last_blk), 0)

    kernel = functools.partial(
        _focal_sum_kernel,
        label_smoothing=label_smoothing,
        full_rows=full_rows,
        rem=rem,
        block_rows=block_rows,
    )

    partials = pl.pallas_call(
        kernel,
        out_shape=jax.ShapeDtypeStruct((num_chunks, 1, 1), jnp.float32),
        grid=(num_chunks, steps),
        in_specs=[
            pl.BlockSpec((block_rows, _LANES), in_map),
            pl.BlockSpec((block_rows, _LANES), in_map),
        ],
        out_specs=pl.BlockSpec((1, 1, 1), lambda c, s: (c, 0, 0)),
        scratch_shapes=[pltpu.VMEM((_SUBLANES, _LANES), jnp.float32)],
        compiler_params=pltpu.CompilerParams(
            dimension_semantics=("parallel", "arbitrary"),
            vmem_limit_bytes=vmem_limit,
        ),
    )(x, t)

    # sum_i mean_i(f_loss) == (1 / (B*H*W)) * sum over all elements
    return jnp.sum(partials) / jnp.float32(n_per_class)


def _reference(inputs, targets, label_smoothing):
    """Pure-JAX reference mirroring the PyTorch module."""
    t = targets
    if label_smoothing:
        t = jnp.where(t == 1.0, 1.0 - label_smoothing, t)
    loss = jnp.float32(0.0)
    C = inputs.shape[1]
    for i in range(C):
        x_i = inputs[:, i]
        t_i = t[:, i]
        bce = jnp.maximum(x_i, 0.0) - x_i * t_i + jnp.log1p(jnp.exp(-jnp.abs(x_i)))
        pt = jnp.exp(-bce)
        f = ALPHA * (1.0 - pt) ** GAMMA * bce
        loss = loss + jnp.mean(f)
    return loss


if __name__ == "__main__":
    key = jax.random.PRNGKey(0)
    k1, k2, k3, k4 = jax.random.split(key, 4)

    label_smoothing = 0.1

    # Primary shape: num_classes = 4, NCHW.
    B, C, H, W = 2, 4, 16, 16
    inputs = jax.random.normal(k1, (B, C, H, W), dtype=jnp.float32)          # logits
    targets = jax.random.bernoulli(k2, 0.5, (B, C, H, W)).astype(jnp.float32)

    loss = jax.block_until_ready(
        binary_focal_loss(inputs, targets, label_smoothing=label_smoothing))
    ref = _reference(inputs, targets, label_smoothing)
    assert jnp.allclose(loss, ref, rtol=1e-4, atol=1e-5), (loss, ref)

    # Ragged shape (total not a multiple of 128) exercises the in-kernel tail mask.
    B2, C2, H2, W2 = 2, 3, 20, 20
    inputs2 = jax.random.normal(k3, (B2, C2, H2, W2), dtype=jnp.float32)
    targets2 = jax.random.bernoulli(k4, 0.5, (B2, C2, H2, W2)).astype(jnp.float32)

    loss2 = jax.block_until_ready(
        binary_focal_loss(inputs2, targets2, label_smoothing=label_smoothing))
    ref2 = _reference(inputs2, targets2, label_smoothing)
    assert jnp.allclose(loss2, ref2, rtol=1e-4, atol=1e-5), (loss2, ref2)

    print("KERNEL_OK")
</pallas_src>

<mosaic_0001>
module attributes {stable_mosaic.version = 11 : i64} {
  func.func @_focal_sum_kernel(%arg0: i32, %arg1: i32, %arg2: memref<32x128xf32, #tpu.memory_space<vmem>>, %arg3: memref<32x128xf32, #tpu.memory_space<vmem>>, %arg4: memref<1x1x1xf32, #tpu.memory_space<vmem>>, %arg5: memref<8x128xf32, #tpu.memory_space<vmem>>) attributes {dimension_semantics = [#tpu.dimension_semantics<parallel>, #tpu.dimension_semantics<arbitrary>], iteration_bounds = array<i64: 1, 1>, scalar_prefetch = 0 : i64, scratch_operands = 1 : i64, tpu.core_type = #tpu.core_type<tc>, window_params = [{transform_indices = @transform_0, window_bounds = array<i64: 32, 128>}, {transform_indices = @transform_1, window_bounds = array<i64: 32, 128>}, {transform_indices = @transform_2, window_bounds = array<i64: 1, 1, 1>}]} {
    %c0_i32 = arith.constant 0 : i32
    %0 = arith.cmpi eq, %arg1, %c0_i32 : i32
    %1 = arith.extui %0 : i1 to i32
    %c0_i32_0 = arith.constant 0 : i32
    %2 = arith.cmpi ne, %1, %c0_i32_0 : i32
    scf.if %2 {
      %cst_14 = arith.constant 0.000000e+00 : f32
      %39 = vector.broadcast %cst_14 : f32 to vector<8x128xf32>
      %c0_15 = arith.constant 0 : index
      %c0_16 = arith.constant 0 : index
      %40 = vector.load %arg5[%c0_15, %c0_16] : memref<8x128xf32, #tpu.memory_space<vmem>>, vector<8x128xf32>
      tpu.vector_store %arg5[%c0_15, %c0_16], %39 {strides = array<i32>} : memref<8x128xf32, #tpu.memory_space<vmem>>, vector<8x128xf32>,
    } else {
    }
    %c0 = arith.constant 0 : index
    %c0_1 = arith.constant 0 : index
    %3 = vector.load %arg2[%c0, %c0_1] : memref<32x128xf32, #tpu.memory_space<vmem>>, vector<32x128xf32>
    %c0_2 = arith.constant 0 : index
    %c0_3 = arith.constant 0 : index
    %4 = vector.load %arg3[%c0_2, %c0_3] : memref<32x128xf32, #tpu.memory_space<vmem>>, vector<32x128xf32>
    %cst = arith.constant 1.000000e+00 : f32
    %5 = vector.broadcast %cst : f32 to vector<32x128xf32>
    %6 = arith.cmpf oeq, %4, %5 : vector<32x128xf32>
    %cst_4 = arith.constant 0.899999976 : f32
    %7 = vector.broadcast %cst_4 : f32 to vector<32x128xf32>
    %8 = arith.select %6, %7, %4 : vector<32x128xi1>, vector<32x128xf32>
    %cst_5 = arith.constant 0.000000e+00 : f32
    %9 = vector.broadcast %cst_5 : f32 to vector<32x128xf32>
    %10 = arith.maximumf %3, %9 : vector<32x128xf32>
    %11 = arith.mulf %3, %8 : vector<32x128xf32>
    %12 = arith.subf %10, %11 : vector<32x128xf32>
    %13 = math.absf %3 : vector<32x128xf32>
    %cst_6 = arith.constant 0.000000e+00 : f32
    %14 = vector.broadcast %cst_6 : f32 to vector<32x128xf32>
    %15 = arith.subf %14, %13 : vector<32x128xf32>
    %16 = math.exp %15 : vector<32x128xf32>
    %17 = math.log1p %16 : vector<32x128xf32>
    %18 = arith.addf %12, %17 : vector<32x128xf32>
    %cst_7 = arith.constant 0.000000e+00 : f32
    %19 = vector.broadcast %cst_7 : f32 to vector<32x128xf32>
    %20 = arith.subf %19, %18 : vector<32x128xf32>
    %21 = math.exp %20 : vector<32x128xf32>
    %cst_8 = arith.constant 1.000000e+00 : f32
    %22 = vector.broadcast %cst_8 : f32 to vector<32x128xf32>
    %23 = arith.subf %22, %21 : vector<32x128xf32>
    %24 = arith.mulf %23, %23 : vector<32x128xf32>
    %25 = arith.mulf %24, %18 : vector<32x128xf32>
    %c1_i32 = arith.constant 1 : i32
    %26 = arith.muli %arg0, %c1_i32 : i32
    %27 = arith.addi %26, %arg1 : i32
    %c32_i32 = arith.constant 32 : i32
    %28 = arith.muli %27, %c32_i32 : i32
    %c32_i32_9 = arith.constant 32 : i32
    %29 = arith.addi %28, %c32_i32_9 : i32
    %c16_i32 = arith.constant 16 : i32
    %30 = arith.cmpi sle, %29, %c16_i32 : i32
    %31 = arith.extui %30 : i1 to i32
    %c0_i32_10 = arith.constant 0 : i32
    %32 = arith.cmpi ne, %31, %c0_i32_10 : i32
    scf.if %32 {
      %c0_14 = arith.constant 0 : index
      %c0_15 = arith.constant 0 : index
      %39 = vector.load %arg5[%c0_14, %c0_15] : memref<8x128xf32, #tpu.memory_space<vmem>>, vector<8x128xf32>
      %40 = vector.shape_cast %25 : vector<32x128xf32> to vector<4x8x128xf32>
      %cst_16 = arith.constant dense<0.000000e+00> : vector<8x128xf32>
      %41 = vector.multi_reduction <add>, %40, %cst_16 [0] : vector<4x8x128xf32> to vector<8x128xf32>
      %42 = arith.addf %39, %41 : vector<8x128xf32>
      %c0_17 = arith.constant 0 : index
      %c0_18 = arith.constant 0 : index
      %43 = vector.load %arg5[%c0_17, %c0_18] : memref<8x128xf32, #tpu.memory_space<vmem>>, vector<8x128xf32>
      tpu.vector_store %arg5[%c0_17, %c0_18], %42 {strides = array<i32>} : memref<8x128xf32, #tpu.memory_space<vmem>>, vector<8x128xf32>,
    } else {
    }
    %true = arith.constant true
    %33 = arith.xori %30, %true : i1
    %34 = arith.extui %33 : i1 to i32
    %c0_i32_11 = arith.constant 0 : i32
    %35 = arith.cmpi ne, %34, %c0_i32_11 : i32
    scf.if %35 {
      %39 = tpu.iota {dimensions = array<i32: 0>} : vector<32x128xi32>
      %40 = vector.broadcast %28 : i32 to vector<32x128xi32>
      %41 = arith.addi %39, %40 : vector<32x128xi32>
      %c16_i32_14 = arith.constant 16 : i32
      %42 = vector.broadcast %c16_i32_14 : i32 to vector<32x128xi32>
      %43 = arith.cmpi slt, %41, %42 : vector<32x128xi32>
      %cst_15 = arith.constant 0.000000e+00 : f32
      %44 = vector.broadcast %cst_15 : f32 to vector<32x128xf32>
      %45 = arith.select %43, %25, %44 : vector<32x128xi1>, vector<32x128xf32>
      %c0_16 = arith.constant 0 : index
      %c0_17 = arith.constant 0 : index
      %46 = vector.load %arg5[%c0_16, %c0_17] : memref<8x128xf32, #tpu.memory_space<vmem>>, vector<8x128xf32>
      %47 = vector.shape_cast %45 : vector<32x128xf32> to vector<4x8x128xf32>
      %cst_18 = arith.constant dense<0.000000e+00> : vector<8x128xf32>
      %48 = vector.multi_reduction <add>, %47, %cst_18 [0] : vector<4x8x128xf32> to vector<8x128xf32>
      %49 = arith.addf %46, %48 : vector<8x128xf32>
      %c0_19 = arith.constant 0 : index
      %c0_20 = arith.constant 0 : index
      %50 = vector.load %arg5[%c0_19, %c0_20] : memref<8x128xf32, #tpu.memory_space<vmem>>, vector<8x128xf32>
      tpu.vector_store %arg5[%c0_19, %c0_20], %49 {strides = array<i32>} : memref<8x128xf32, #tpu.memory_space<vmem>>, vector<8x128xf32>,
    } else {
    }
    %c0_i32_12 = arith.constant 0 : i32
    %36 = arith.cmpi eq, %arg1, %c0_i32_12 : i32
    %37 = arith.extui %36 : i1 to i32
    %c0_i32_13 = arith.constant 0 : i32
    %38 = arith.cmpi ne, %37, %c0_i32_13 : i32
    scf.if %38 {
      %c0_14 = arith.constant 0 : index
      %c0_15 = arith.constant 0 : index
      %39 = vector.load %arg5[%c0_14, %c0_15] : memref<8x128xf32, #tpu.memory_space<vmem>>, vector<8x128xf32>
      %40 = vector.shape_cast %39 : vector<8x128xf32> to vector<1x8x128xf32>
      %cst_16 = arith.constant dense<0.000000e+00> : vector<1xf32>
      %41 = vector.multi_reduction <add>, %40, %cst_16 [1, 2] : vector<1x8x128xf32> to vector<1xf32>
      %42 = vector.shape_cast %41 : vector<1xf32> to vector<1x1x1xf32>
      %43 = vector.extract %42[0, 0, 0] : f32 from vector<1x1x1xf32>
      %44 = vector.broadcast %43 : f32 to vector<1x1xf32>
      %c0_17 = arith.constant 0 : index
      %c0_18 = arith.constant 0 : index
      %c0_19 = arith.constant 0 : index
      %45 = vector.load %arg4[%c0_17, %c0_18, %c0_19] : memref<1x1x1xf32, #tpu.memory_space<vmem>>, vector<1x1x1xf32>
      %46 = vector.shape_cast %45 : vector<1x1x1xf32> to vector<1x1xf32>
      %47 = vector.shape_cast %44 : vector<1x1xf32> to vector<1x1x1xf32>
      tpu.vector_store %arg4[%c0_17, %c0_18, %c0_19], %47 {strides = array<i32>} : memref<1x1x1xf32, #tpu.memory_space<vmem>>, vector<1x1x1xf32>,
    } else {
    }
    return
  }
  func.func @transform_0(%arg0: i32, %arg1: i32) -> (i32, i32) {
    %c1_i32 = arith.constant 1 : i32
    %0 = arith.muli %arg0, %c1_i32 : i32
    %1 = arith.addi %0, %arg1 : i32
    %c0_i32 = arith.constant 0 : i32
    %c0_i32_0 = arith.constant 0 : i32
    return %1, %c0_i32 : i32, i32
  }
  func.func @transform_1(%arg0: i32, %arg1: i32) -> (i32, i32) {
    %c1_i32 = arith.constant 1 : i32
    %0 = arith.muli %arg0, %c1_i32 : i32
    %1 = arith.addi %0, %arg1 : i32
    %c0_i32 = arith.constant 0 : i32
    %c0_i32_0 = arith.constant 0 : i32
    return %1, %c0_i32 : i32, i32
  }
  func.func @transform_2(%arg0: i32, %arg1: i32) -> (i32, i32, i32) {
    %c0_i32 = arith.constant 0 : i32
    %c0_i32_0 = arith.constant 0 : i32
    %c0_i32_1 = arith.constant 0 : i32
    return %arg0, %c0_i32, %c0_i32_0 : i32, i32, i32
  }
}

</mosaic_0001>

<llo_original>
// kernel: tpu_custom_call.1
$region0: #{tpu_custom_call.1}
  #allocation0 [shape = 'u32[]', space=smem, size = 0x4, offset = 0x4, fixed_abs, tag = 'smem constant byte address 0x4 - core index']
  #allocation1 [shape = 'u32[144,128]{1,0:T(1,128)}', space=vmem, size = 0x12000, scoped, tag = 'internal scratch']
  #allocation2 [shape = 'f32[8,128]{1,0:T(8,128)}', space=vmem, size = 0x1000, scoped, tag = 'scratch operand']
  %s0 = inlined_call_operand.hbm [shape: f32[16,128], index: 0, kind: input, shape index: {}]
  %s1 = inlined_call_operand.hbm [shape: f32[16,128], index: 1, kind: input, shape index: {}]
  %s2 = inlined_call_operand.hbm [shape: f32[1,1,1], index: 2, kind: output, shape index: {}]
  %s3 = sld [smem:[#allocation0]]
  $region42: #{tpu_custom_call.1} parent=0
    _
  %s5 = ssub.s32 1, %s3
  %s6 = scalar_select 0, %s5, %s3
  $region1: #{tpu_custom_call.1} parent=0
    #allocation3 [shape = 'u8[16384]{0}', space=vmem, size = 0x4000, scoped, tag = 'input window, operand 0, single buffered']
    #allocation4 [shape = 's32[1]{0}', space=sflag, size = 0x4, scoped, tag = 'scoped memory for tpu_custom_call.1']
    #allocation5 [shape = 's32[1]{0}', space=sflag, size = 0x4, scoped, tag = 'scoped memory for tpu_custom_call.1']
    #allocation6 [shape = 'u8[16384]{0}', space=vmem, size = 0x4000, scoped, tag = 'input window, operand 1, single buffered']
    #allocation7 [shape = 's32[1]{0}', space=sflag, size = 0x4, scoped, tag = 'scoped memory for tpu_custom_call.1']
    #allocation8 [shape = 'u8[512]{0}', space=vmem, size = 0x400, scoped, tag = 'output window, operand 0, single buffered']
    %7 = vsyncpa [#allocation4], 0
    %8 = vsyncpa [#allocation7], 0
    %9 = vsyncpa [#allocation5], 0
    // Predicated region
    $region2: #{tpu_custom_call.1} parent=1 // pred_check
      _
    $region3: #{tpu_custom_call.1} parent=1 // pred_check_branch
      %11 = sbr.rel (0) target = $region5
    $region4: #{tpu_custom_call.1} parent=1 // pred_region
      %s12 = sadd.s32 0, 0
      %s13 = smul.u32 4, %s12
      %s14 = ssub.s32 2, %s13
      %s15 = smul.u32 128, %s14
      %s17 = ssub.s32 512, %s15
      %18 = vsyncadd [#allocation4], %s17
      %p19 = scmp.ne.s32.totalorder 0, %s15
      %s20 = smul.addr %s13, 128
      %s21 = scalar_lea.hbm %s0, %s20
      %s22 = smul.u32 8, %s14
      %s23 = sshll.u32 [#allocation3], 4
      %s24 = int_to_ptr.vmem [resolvable:$true] %s23
      %s25 = sshll.u32 %s22, 4
      %29 = dma.hbm_to_vmem [thread:$0]  (%p19), %s21, %s25, %s24, [#allocation4], 128, 128, 8
    $region5: #{tpu_custom_call.1} parent=1 // pred_fallthru
      _
    // Predicated region
    $region6: #{tpu_custom_call.1} parent=1 // pred_check
      _
    $region7: #{tpu_custom_call.1} parent=1 // pred_check_branch
      %31 = sbr.rel (0) target = $region9
    $region8: #{tpu_custom_call.1} parent=1 // pred_region
      %s32 = sadd.s32 0, 0
      %s33 = smul.u32 4, %s32
      %s34 = ssub.s32 2, %s33
      %s35 = smul.u32 128, %s34
      %s37 = ssub.s32 512, %s35
      %38 = vsyncadd [#allocation7], %s37
      %p39 = scmp.ne.s32.totalorder 0, %s35
      %s40 = smul.addr %s33, 128
      %s41 = scalar_lea.hbm %s1, %s40
      %s42 = smul.u32 8, %s34
      %s43 = sshll.u32 [#allocation6], 4
      %s44 = int_to_ptr.vmem [resolvable:$true] %s43
      %s45 = sshll.u32 %s42, 4
      %49 = dma.hbm_to_vmem [thread:$0]  (%p39), %s41, %s45, %s44, [#allocation7], 128, 128, 8
    $region9: #{tpu_custom_call.1} parent=1 // pred_fallthru
      _
    // Predicated region
    $region10: #{tpu_custom_call.1} parent=1 // pred_check
      _
    $region11: #{tpu_custom_call.1} parent=1 // pred_check_branch
      %51 = sbr.rel (0) target = $region13
    $region12: #{tpu_custom_call.1} parent=1 // pred_region
      %52 = dma.done [#allocation4], 512
    $region13: #{tpu_custom_call.1} parent=1 // pred_fallthru
      _
    // Predicated region
    $region14: #{tpu_custom_call.1} parent=1 // pred_check
      _
    $region15: #{tpu_custom_call.1} parent=1 // pred_check_branch
      %54 = sbr.rel (0) target = $region17
    $region16: #{tpu_custom_call.1} parent=1 // pred_region
      %55 = dma.done [#allocation7], 512
    $region17: #{tpu_custom_call.1} parent=1 // pred_fallthru
      _
    %s56 = sadd.s32 0, 0
    %s57 = smul.u32 4, %s56
    %s58 = ssub.s32 2, %s57
    %s59 = smul.u32 128, %s58
    %s60 = sadd.s32 0, 0
    %s61 = smul.u32 4, %s60
    %s62 = ssub.s32 2, %s61
    %s63 = smul.u32 128, %s62
    %p64 = scmp.eq.s32.totalorder 0, 0
    // Predicated region
    $region18: #{tpu_custom_call.1} parent=1 // pred_check
      %p65 = pneg %p64
    $region19: #{tpu_custom_call.1} parent=1 // pred_check_branch
      %67 = sbr.rel (%p65) target = $region21
    $region20: #{tpu_custom_call.1} parent=1 // pred_region
      %68 = vst [vmem:[#allocation2] sm:$0xff] 0.0
    $region21: #{tpu_custom_call.1} parent=1 // pred_fallthru
      _
    %v69 = vld [vmem:[#allocation3] sm:$0xff]
    %v70 = vld [vmem:[#allocation3 + $0x8] sm:$0xff]
    %v71 = vld [vmem:[#allocation3 + $0x10] sm:$0xff]
    %v72 = vld [vmem:[#allocation3 + $0x18] sm:$0xff]
    %v73 = vld [vmem:[#allocation6] sm:$0xff]
    %v74 = vld [vmem:[#allocation6 + $0x8] sm:$0xff]
    %v75 = vld [vmem:[#allocation6 + $0x10] sm:$0xff]
    %v76 = vld [vmem:[#allocation6 + $0x18] sm:$0xff]
    %vm77 = vcmp.eq.f32.partialorder %v73, 1.0
    %vm78 = vcmp.eq.f32.partialorder %v74, 1.0
    %vm79 = vcmp.eq.f32.partialorder %v75, 1.0
    %vm80 = vcmp.eq.f32.partialorder %v76, 1.0
    %v81 = vsel %vm77, 0.9, %v73
    %v82 = vsel %vm78, 0.9, %v74
    %v83 = vsel %vm79, 0.9, %v75
    %v84 = vsel %vm80, 0.9, %v76
    %v85 = vmax.f32 %v69, 0.0
    %v86 = vmax.f32 %v70, 0.0
    %v87 = vmax.f32 %v71, 0.0
    %v88 = vmax.f32 %v72, 0.0
    %v89 = vmul.f32 %v69, %v81
    %v90 = vmul.f32 %v70, %v82
    %v91 = vmul.f32 %v71, %v83
    %v92 = vmul.f32 %v72, %v84
    %v93 = vsub.f32 %v85, %v89
    %v94 = vsub.f32 %v86, %v90
    %v95 = vsub.f32 %v87, %v91
    %v96 = vsub.f32 %v88, %v92
    %v97 = vand.u32 2147483647, %v69
    %v98 = vand.u32 2147483647, %v70
    %v99 = vand.u32 2147483647, %v71
    %v100 = vand.u32 2147483647, %v72
    %v101 = vsub.f32 0.0, %v97
    %v102 = vsub.f32 0.0, %v98
    %v103 = vsub.f32 0.0, %v99
    %v104 = vsub.f32 0.0, %v100
    %v105 = vmul.f32 %v101, 1.442695
    %v106 = vpow.pop %v105
    %v107 = vmul.f32 %v102, 1.442695
    %v108 = vpow.pop %v107
    %v109 = vmul.f32 %v103, 1.442695
    %v110 = vpow.pop %v109
    %v111 = vmul.f32 %v104, 1.442695
    %v112 = vpow.pop %v111
    %v113 = vadd.f32 %v106, 1.0
    %v114 = vlog2.pop %v113
    %v115 = vmul.f32 %v114, 0.6931472
    %v116 = vmul.f32 -0.5, %v106
    %v117 = vadd.f32 %v116, 1.0
    %v118 = vmul.f32 %v117, %v106
    %v119 = vand.u32 2147483647, %v106
    %vm120 = vcmp.lt.f32.partialorder %v119, 0.0004427343
    %v121 = vsel %vm120, %v118, %v115
    %v122 = vadd.f32 %v108, 1.0
    %v123 = vlog2.pop %v122
    %v124 = vmul.f32 %v123, 0.6931472
    %v125 = vmul.f32 -0.5, %v108
    %v126 = vadd.f32 %v125, 1.0
    %v127 = vmul.f32 %v126, %v108
    %v128 = vand.u32 2147483647, %v108
    %vm129 = vcmp.lt.f32.partialorder %v128, 0.0004427343
    %v130 = vsel %vm129, %v127, %v124
    %v131 = vadd.f32 %v110, 1.0
    %v132 = vlog2.pop %v131
    %v133 = vmul.f32 %v132, 0.6931472
    %v134 = vmul.f32 -0.5, %v110
    %v135 = vadd.f32 %v134, 1.0
    %v136 = vmul.f32 %v135, %v110
    %v137 = vand.u32 2147483647, %v110
    %vm138 = vcmp.lt.f32.partialorder %v137, 0.0004427343
    %v139 = vsel %vm138, %v136, %v133
    %v140 = vadd.f32 %v112, 1.0
    %v141 = vlog2.pop %v140
    %v142 = vmul.f32 %v141, 0.6931472
    %v143 = vmul.f32 -0.5, %v112
    %v144 = vadd.f32 %v143, 1.0
    %v145 = vmul.f32 %v144, %v112
    %v146 = vand.u32 2147483647, %v112
    %vm147 = vcmp.lt.f32.partialorder %v146, 0.0004427343
    %v148 = vsel %vm147, %v145, %v142
    %v149 = vadd.f32 %v93, %v121
    %v150 = vadd.f32 %v94, %v130
    %v151 = vadd.f32 %v95, %v139
    %v152 = vadd.f32 %v96, %v148
    %v153 = vsub.f32 0.0, %v149
    %v154 = vsub.f32 0.0, %v150
    %v155 = vsub.f32 0.0, %v151
    %v156 = vsub.f32 0.0, %v152
    %v157 = vmul.f32 %v153, 1.442695
    %v158 = vpow.pop %v157
    %v159 = vmul.f32 %v154, 1.442695
    %v160 = vpow.pop %v159
    %v161 = vmul.f32 %v155, 1.442695
    %v162 = vpow.pop %v161
    %v163 = vmul.f32 %v156, 1.442695
    %v164 = vpow.pop %v163
    %v165 = vsub.f32 1.0, %v158
    %v166 = vsub.f32 1.0, %v160
    %v167 = vsub.f32 1.0, %v162
    %v168 = vsub.f32 1.0, %v164
    %v169 = vmul.f32 %v165, %v165
    %v170 = vmul.f32 %v166, %v166
    %v171 = vmul.f32 %v167, %v167
    %v172 = vmul.f32 %v168, %v168
    %v173 = vmul.f32 %v169, %v149
    %v174 = vmul.f32 %v170, %v150
    %v175 = vmul.f32 %v171, %v151
    %v176 = vmul.f32 %v172, %v152
    %s177 = sadd.s32 0, 0
    %s178 = smul.u32 %s177, 32
    %s179 = sadd.s32 %s178, 32
    %p180 = scmp.le.s32.totalorder %s179, 16
    // Predicated region
    $region22: #{tpu_custom_call.1} parent=1 // pred_check
      %p181 = pneg %p180
    $region23: #{tpu_custom_call.1} parent=1 // pred_check_branch
      %183 = sbr.rel (%p181) target = $region25
    $region24: #{tpu_custom_call.1} parent=1 // pred_region
      %v184 = vld [vmem:[#allocation2] sm:$0xff]
      %v185 = vadd.f32 %v173, %v174
      %v186 = vadd.f32 %v185, %v175
      %v187 = vadd.f32 %v186, %v176
      %v188 = vadd.f32 %v184, %v187
      %189 = vst [vmem:[#allocation2] sm:$0xff] %v188
    $region25: #{tpu_custom_call.1} parent=1 // pred_fallthru
      _
    %p190 = scmp.gt.s32.totalorder %s179, 16
    // Predicated region
    $region26: #{tpu_custom_call.1} parent=1 // pred_check
      %p191 = pneg %p190
    $region27: #{tpu_custom_call.1} parent=1 // pred_check_branch
      %193 = sbr.rel (%p191) target = $region29
    $region28: #{tpu_custom_call.1} parent=1 // pred_region
      %v194 = vlaneseq
      %v195 = vshrl.u32 %v194, 7
      %v196 = vadd.s32 %v195, 8
      %v197 = vadd.s32 %v195, 16
      %v198 = vadd.s32 %v195, 24
      %v199 = vstv %s178
      %v200 = vadd.s32 %v195, %v199
      %v201 = vadd.s32 %v196, %v199
      %v202 = vadd.s32 %v197, %v199
      %v203 = vadd.s32 %v198, %v199
      %vm204 = vcmp.lt.s32.totalorder %v200, 16
      %vm205 = vcmp.lt.s32.totalorder %v201, 16
      %vm206 = vcmp.lt.s32.totalorder %v202, 16
      %vm207 = vcmp.lt.s32.totalorder %v203, 16
      %v208 = vsel %vm204, %v173, 0.0
      %v209 = vsel %vm205, %v174, 0.0
      %v210 = vsel %vm206, %v175, 0.0
      %v211 = vsel %vm207, %v176, 0.0
      %v212 = vld [vmem:[#allocation2] sm:$0xff]
      %v213 = vadd.f32 %v208, %v209
      %v214 = vadd.f32 %v213, %v210
      %v215 = vadd.f32 %v214, %v211
      %v216 = vadd.f32 %v212, %v215
      %217 = vst [vmem:[#allocation2] sm:$0xff] %v216
    $region29: #{tpu_custom_call.1} parent=1 // pred_fallthru
      _
    // Predicated region
    $region30: #{tpu_custom_call.1} parent=1 // pred_check
      %p218 = pneg %p64
    $region31: #{tpu_custom_call.1} parent=1 // pred_check_branch
      %220 = sbr.rel (%p218) target = $region33
    $region32: #{tpu_custom_call.1} parent=1 // pred_region
      %v221 = vld [vmem:[#allocation2] sm:$0xff]
      %222 = vadd.xlane.f32.xlu0 %v221
      %v223 = vpop.xlane.xlu0 %222
      %v224 = vrot.slane %v223, 4
      %v225 = vadd.f32 %v223, %v224
      %v226 = vrot.slane %v225, 2
      %v227 = vadd.f32 %v225, %v226
      %v228 = vrot.slane %v227, 1
      %v229 = vadd.f32 %v227, %v228
      %s230 = vtos %v229
      %v231 = vstv %s230
      %vm232 = vcmask 0
      %233 = vst.msk [vmem:[#allocation8] sm:$0x1] %vm232, %v231
    $region33: #{tpu_custom_call.1} parent=1 // pred_fallthru
      _
    // Predicated region
    $region34: #{tpu_custom_call.1} parent=1 // pred_check
      _
    $region35: #{tpu_custom_call.1} parent=1 // pred_check_branch
      %235 = sbr.rel (0) target = $region37
    $region36: #{tpu_custom_call.1} parent=1 // pred_region
      %s237 = ssub.s32 16, 16
      %238 = vsyncadd [#allocation5], %s237
      %s240 = sshll.u32 [#allocation8], 4
      %s241 = int_to_ptr.vmem [resolvable:$true] %s240
      %243 = dma.vmem_to_hbm [thread:$0]  %s241, 16, %s2, [#allocation5]
    $region37: #{tpu_custom_call.1} parent=1 // pred_fallthru
      _
    // Predicated region
    $region38: #{tpu_custom_call.1} parent=1 // pred_check
      _
    $region39: #{tpu_custom_call.1} parent=1 // pred_check_branch
      %245 = sbr.rel (0) target = $region41
    $region40: #{tpu_custom_call.1} parent=1 // pred_region
      %246 = dma.done [#allocation5], 16
    $region41: #{tpu_custom_call.1} parent=1 // pred_fallthru
      _
    %247 = vsyncpa [#allocation4], 1
    %248 = vsyncpa [#allocation7], 1
    %249 = vsyncpa [#allocation5], 1

</llo_original>
